<compile_context>
chip_gen: v6e
topology: v6e:2x2x1
jax: 0.10.0
libtpu: 0.0.40
codegen_flags: <defaults>
</compile_context>

<pallas_src>
import functools

import jax
import jax.numpy as jnp
from jax import lax
from jax.experimental import pallas as pl
from jax.experimental.pallas import tpu as pltpu


def _pick_block_rows(n_rows, row_bytes, target_bytes=2 * 1024 * 1024):
    """Rows per block: ~1-2 MiB per buffer (v5e friendly), multiple of 8, <=512."""
    rows = max(8, target_bytes // max(int(row_bytes), 1))
    rows = (rows // 8) * 8
    rows = max(8, min(rows, 512))
    if rows >= n_rows:
        return n_rows  # full extent is always a legal block dim
    return rows


def _stats_kernel(x_ref, stats_ref, acc_ref, *, total_rows, block_rows, n_elems):
    """Streaming reduction over (rows, HW) tiles -> [mean, std(unbiased), min, max]."""
    step = pl.program_id(0)

    @pl.when(step == 0)
    def _():
        acc_ref[0] = jnp.float32(0.0)        # running sum
        acc_ref[1] = jnp.float32(0.0)        # running sum of squares
        acc_ref[2] = jnp.float32(jnp.inf)    # running min
        acc_ref[3] = jnp.float32(-jnp.inf)   # running max

    x = x_ref[...].astype(jnp.float32)

    if total_rows % block_rows != 0:
        # Last block is ragged: mask out the padded rows.
        rid = step * block_rows + lax.broadcasted_iota(jnp.int32, x.shape, 0)
        valid = rid < total_rows
        x_sum = jnp.where(valid, x, jnp.float32(0.0))
        x_min = jnp.where(valid, x, jnp.float32(jnp.inf))
        x_max = jnp.where(valid, x, jnp.float32(-jnp.inf))
    else:
        x_sum = x
        x_min = x
        x_max = x

    acc_ref[0] += jnp.sum(x_sum)
    acc_ref[1] += jnp.sum(x_sum * x_sum)
    acc_ref[2] = jnp.minimum(acc_ref[2], jnp.min(x_min))
    acc_ref[3] = jnp.maximum(acc_ref[3], jnp.max(x_max))

    @pl.when(step == pl.num_programs(0) - 1)
    def _():
        total = acc_ref[0]
        sumsq = acc_ref[1]
        n = jnp.float32(n_elems)
        mean = total / n
        var = (sumsq - n * mean * mean) / jnp.float32(max(n_elems - 1, 1))
        stats_ref[0] = mean
        stats_ref[1] = jnp.sqrt(jnp.maximum(var, jnp.float32(0.0)))
        stats_ref[2] = acc_ref[2]
        stats_ref[3] = acc_ref[3]


def _erase_kernel(stats_ref, params_ref, row_ref, col_ref, x_ref, z_ref, o_ref,
                  *, szx, szy, max_num):
    """One combined patch mask -> single select + clamp over a (rows, HW) tile.

    stats_ref : SMEM f32 (4,)            [mean, std, min, max]
    params_ref: SMEM i32 (2*max_num,)    [stx0, sty0, stx1, sty1, ...]; inactive
                                         patches have offsets pushed out of range.
    row_ref   : VMEM i32 (1, HW)         spatial row index of each flattened pixel
    col_ref   : VMEM i32 (1, HW)         spatial col index of each flattened pixel
    x_ref     : VMEM (rows, HW)
    z_ref     : VMEM (rows, HW)          shared standard-normal noise
    o_ref     : VMEM (rows, HW)
    """
    xm = stats_ref[0]
    xs = stats_ref[1]
    mn = stats_ref[2]
    mx = stats_ref[3]

    row = row_ref[...]          # (1, HW) — mask is built once per plane, then broadcast
    col = col_ref[...]
    mask = jnp.zeros(row.shape, dtype=jnp.bool_)
    for i in range(max_num):    # static unroll; cheap (operates on a (1, HW) vector)
        stx = params_ref[2 * i]
        sty = params_ref[2 * i + 1]
        inside = ((row >= stx) & (row < stx + szx)
                  & (col >= sty) & (col < sty + szy))
        mask = jnp.logical_or(mask, inside)

    x = x_ref[...].astype(jnp.float32)
    noise = xm + xs * z_ref[...].astype(jnp.float32)
    y = jnp.where(mask, noise, x)                   # one select per element
    o_ref[...] = jnp.clip(y, mn, mx).astype(o_ref.dtype)


@functools.partial(jax.jit, static_argnames=("pct", "max_num"))
def rand_erase(x, key, pct=0.2, max_num=5):
    """Pallas implementation of RandErase.forward (functional; returns new array)."""
    N, C, H, W = x.shape
    NC, HW = N * C, H * W
    szx = int(H * pct)
    szy = int(W * pct)
    n_elems = N * C * H * W

    x2 = x.reshape(NC, HW)                           # lane-dense 2-D slab
    block_rows = _pick_block_rows(NC, HW * x.dtype.itemsize)
    grid_rows = pl.cdiv(NC, block_rows)

    # --- kernel 1: one-pass tiled stats reduction ---
    stats = pl.pallas_call(
        functools.partial(_stats_kernel, total_rows=NC, block_rows=block_rows,
                          n_elems=n_elems),
        grid=(grid_rows,),
        in_specs=[pl.BlockSpec((block_rows, HW), lambda i: (i, 0))],
        out_specs=pl.BlockSpec(memory_space=pltpu.MemorySpace.SMEM),
        out_shape=jax.ShapeDtypeStruct((4,), jnp.float32),
        scratch_shapes=[pltpu.SMEM((4,), jnp.float32)],
        compiler_params=pltpu.CompilerParams(
            dimension_semantics=("arbitrary",),       # serial reduction axis
            vmem_limit_bytes=32 * 1024 * 1024),
    )(x2)

    # --- randomness (deterministic via PRNGKey), mirrors random.* in the module ---
    knum, kpos, kz = jax.random.split(key, 3)
    num = jax.random.randint(knum, (), 0, max_num + 1, dtype=jnp.int32)  # inclusive hi
    u = jax.random.uniform(kpos, (max_num, 2))
    stx = (u[:, 0] * ((1.0 - pct) * H)).astype(jnp.int32)
    sty = (u[:, 1] * ((1.0 - pct) * W)).astype(jnp.int32)
    active = jnp.arange(max_num, dtype=jnp.int32) < num
    stx = jnp.where(active, stx, jnp.int32(H))       # inactive patch -> out of range
    sty = jnp.where(active, sty, jnp.int32(W))
    params = jnp.stack([stx, sty], axis=-1).reshape(-1).astype(jnp.int32)

    # Shared noise field (one draw per element; patches overwrite each other anyway).
    z2 = jax.random.normal(kz, (NC, HW), dtype=x.dtype)

    # Tiny per-pixel spatial index planes (avoids vector div/mod inside the kernel).
    rowp = (jnp.arange(HW, dtype=jnp.int32) // W).reshape(1, HW)
    colp = (jnp.arange(HW, dtype=jnp.int32) % W).reshape(1, HW)

    # --- kernel 2: patch overwrite + clamp (tiled, output aliased onto x) ---
    kern = functools.partial(_erase_kernel, szx=szx, szy=szy, max_num=max_num)
    out2 = pl.pallas_call(
        kern,
        grid=(grid_rows,),
        in_specs=[
            pl.BlockSpec(memory_space=pltpu.MemorySpace.SMEM),   # stats
            pl.BlockSpec(memory_space=pltpu.MemorySpace.SMEM),   # params
            pl.BlockSpec((1, HW), lambda i: (0, 0)),             # row plane (resident)
            pl.BlockSpec((1, HW), lambda i: (0, 0)),             # col plane (resident)
            pl.BlockSpec((block_rows, HW), lambda i: (i, 0)),    # x
            pl.BlockSpec((block_rows, HW), lambda i: (i, 0)),    # z
        ],
        out_specs=pl.BlockSpec((block_rows, HW), lambda i: (i, 0)),
        out_shape=jax.ShapeDtypeStruct((NC, HW), x.dtype),
        input_output_aliases={4: 0},                  # reuse x's buffer for the output
        compiler_params=pltpu.CompilerParams(
            dimension_semantics=("parallel",),        # rows shard across v7x's 2 TCs
            vmem_limit_bytes=32 * 1024 * 1024),
    )(stats, params, rowp, colp, x2, z2)

    return out2.reshape(N, C, H, W)


if __name__ == "__main__":
    key = jax.random.PRNGKey(0)
    kx, kaug = jax.random.split(key)
    x = jax.random.normal(kx, (2, 4, 16, 16), dtype=jnp.float32)

    y = rand_erase(x, kaug, pct=0.2, max_num=5)
    y = jax.block_until_ready(y)

    assert y.shape == x.shape and y.dtype == x.dtype
    # output must be clamped to the original [min, max] range
    assert float(jnp.min(y)) >= float(jnp.min(x)) - 1e-5
    assert float(jnp.max(y)) <= float(jnp.max(x)) + 1e-5
    print("KERNEL_OK")
</pallas_src>

<mosaic_0001>
module attributes {stable_mosaic.version = 11 : i64} {
  func.func @_stats_kernel(%arg0: i32, %arg1: memref<8x256xf32, #tpu.memory_space<vmem>>, %arg2: memref<4xf32, #tpu.memory_space<smem>>, %arg3: memref<4xf32, #tpu.memory_space<smem>>) attributes {dimension_semantics = [#tpu.dimension_semantics<arbitrary>], iteration_bounds = array<i64: 1>, scalar_prefetch = 0 : i64, scratch_operands = 1 : i64, tpu.core_type = #tpu.core_type<tc>, window_params = [{transform_indices = @transform_0, window_bounds = array<i64: 8, 256>}, {transform_indices = @transform_1, window_bounds = array<i64: 4>}]} {
    %c0_i32 = arith.constant 0 : i32
    %0 = arith.cmpi eq, %arg0, %c0_i32 : i32
    %1 = arith.extui %0 : i1 to i32
    %c0_i32_0 = arith.constant 0 : i32
    %2 = arith.cmpi ne, %1, %c0_i32_0 : i32
    scf.if %2 {
      %cst_12 = arith.constant 0.000000e+00 : f32
      %c0_13 = arith.constant 0 : index
      %36 = memref.load %arg3[%c0_13] : memref<4xf32, #tpu.memory_space<smem>>
      memref.store %cst_12, %arg3[%c0_13] : memref<4xf32, #tpu.memory_space<smem>>
      %cst_14 = arith.constant 0.000000e+00 : f32
      %c1_15 = arith.constant 1 : index
      %37 = memref.load %arg3[%c1_15] : memref<4xf32, #tpu.memory_space<smem>>
      memref.store %cst_14, %arg3[%c1_15] : memref<4xf32, #tpu.memory_space<smem>>
      %cst_16 = arith.constant 0x7F800000 : f32
      %c2_17 = arith.constant 2 : index
      %38 = memref.load %arg3[%c2_17] : memref<4xf32, #tpu.memory_space<smem>>
      memref.store %cst_16, %arg3[%c2_17] : memref<4xf32, #tpu.memory_space<smem>>
      %cst_18 = arith.constant 0xFF800000 : f32
      %c3_19 = arith.constant 3 : index
      %39 = memref.load %arg3[%c3_19] : memref<4xf32, #tpu.memory_space<smem>>
      memref.store %cst_18, %arg3[%c3_19] : memref<4xf32, #tpu.memory_space<smem>>
    } else {
    }
    %c0 = arith.constant 0 : index
    %c0_1 = arith.constant 0 : index
    %3 = vector.load %arg1[%c0, %c0_1] : memref<8x256xf32, #tpu.memory_space<vmem>>, vector<8x256xf32>
    %c0_2 = arith.constant 0 : index
    %4 = memref.load %arg3[%c0_2] : memref<4xf32, #tpu.memory_space<smem>>
    %5 = vector.shape_cast %3 : vector<8x256xf32> to vector<1x8x256xf32>
    %cst = arith.constant dense<0.000000e+00> : vector<1xf32>
    %6 = vector.multi_reduction <add>, %5, %cst [1, 2] : vector<1x8x256xf32> to vector<1xf32>
    %7 = vector.shape_cast %6 : vector<1xf32> to vector<1x1x1xf32>
    %8 = vector.extract %7[0, 0, 0] : f32 from vector<1x1x1xf32>
    %9 = arith.addf %4, %8 : f32
    %c0_3 = arith.constant 0 : index
    %10 = memref.load %arg3[%c0_3] : memref<4xf32, #tpu.memory_space<smem>>
    memref.store %9, %arg3[%c0_3] : memref<4xf32, #tpu.memory_space<smem>>
    %c1 = arith.constant 1 : index
    %11 = memref.load %arg3[%c1] : memref<4xf32, #tpu.memory_space<smem>>
    %12 = arith.mulf %3, %3 : vector<8x256xf32>
    %13 = vector.shape_cast %12 : vector<8x256xf32> to vector<1x8x256xf32>
    %cst_4 = arith.constant dense<0.000000e+00> : vector<1xf32>
    %14 = vector.multi_reduction <add>, %13, %cst_4 [1, 2] : vector<1x8x256xf32> to vector<1xf32>
    %15 = vector.shape_cast %14 : vector<1xf32> to vector<1x1x1xf32>
    %16 = vector.extract %15[0, 0, 0] : f32 from vector<1x1x1xf32>
    %17 = arith.addf %11, %16 : f32
    %c1_5 = arith.constant 1 : index
    %18 = memref.load %arg3[%c1_5] : memref<4xf32, #tpu.memory_space<smem>>
    memref.store %17, %arg3[%c1_5] : memref<4xf32, #tpu.memory_space<smem>>
    %c2 = arith.constant 2 : index
    %19 = memref.load %arg3[%c2] : memref<4xf32, #tpu.memory_space<smem>>
    %20 = vector.shape_cast %3 : vector<8x256xf32> to vector<1x8x256xf32>
    %cst_6 = arith.constant dense<0x7F800000> : vector<1xf32>
    %21 = vector.multi_reduction <minimumf>, %20, %cst_6 [1, 2] : vector<1x8x256xf32> to vector<1xf32>
    %22 = vector.shape_cast %21 : vector<1xf32> to vector<1x1x1xf32>
    %23 = vector.extract %22[0, 0, 0] : f32 from vector<1x1x1xf32>
    %24 = arith.minimumf %19, %23 : f32
    %c2_7 = arith.constant 2 : index
    %25 = memref.load %arg3[%c2_7] : memref<4xf32, #tpu.memory_space<smem>>
    memref.store %24, %arg3[%c2_7] : memref<4xf32, #tpu.memory_space<smem>>
    %c3 = arith.constant 3 : index
    %26 = memref.load %arg3[%c3] : memref<4xf32, #tpu.memory_space<smem>>
    %27 = vector.shape_cast %3 : vector<8x256xf32> to vector<1x8x256xf32>
    %cst_8 = arith.constant dense<0xFF800000> : vector<1xf32>
    %28 = vector.multi_reduction <maximumf>, %27, %cst_8 [1, 2] : vector<1x8x256xf32> to vector<1xf32>
    %29 = vector.shape_cast %28 : vector<1xf32> to vector<1x1x1xf32>
    %30 = vector.extract %29[0, 0, 0] : f32 from vector<1x1x1xf32>
    %31 = arith.maximumf %26, %30 : f32
    %c3_9 = arith.constant 3 : index
    %32 = memref.load %arg3[%c3_9] : memref<4xf32, #tpu.memory_space<smem>>
    memref.store %31, %arg3[%c3_9] : memref<4xf32, #tpu.memory_space<smem>>
    %c0_i32_10 = arith.constant 0 : i32
    %33 = arith.cmpi eq, %arg0, %c0_i32_10 : i32
    %34 = arith.extui %33 : i1 to i32
    %c0_i32_11 = arith.constant 0 : i32
    %35 = arith.cmpi ne, %34, %c0_i32_11 : i32
    scf.if %35 {
      %c0_12 = arith.constant 0 : index
      %36 = memref.load %arg3[%c0_12] : memref<4xf32, #tpu.memory_space<smem>>
      %c1_13 = arith.constant 1 : index
      %37 = memref.load %arg3[%c1_13] : memref<4xf32, #tpu.memory_space<smem>>
      %cst_14 = arith.constant 2.048000e+03 : f32
      %38 = arith.divf %36, %cst_14 : f32
      %cst_15 = arith.constant 2.048000e+03 : f32
      %39 = arith.mulf %cst_15, %38 : f32
      %40 = arith.mulf %39, %38 : f32
      %41 = arith.subf %37, %40 : f32
      %cst_16 = arith.constant 2.047000e+03 : f32
      %42 = arith.divf %41, %cst_16 : f32
      %c0_17 = arith.constant 0 : index
      %43 = memref.load %arg2[%c0_17] : memref<4xf32, #tpu.memory_space<smem>>
      memref.store %38, %arg2[%c0_17] : memref<4xf32, #tpu.memory_space<smem>>
      %cst_18 = arith.constant 0.000000e+00 : f32
      %44 = arith.maximumf %42, %cst_18 : f32
      %45 = math.sqrt %44 : f32
      %c1_19 = arith.constant 1 : index
      %46 = memref.load %arg2[%c1_19] : memref<4xf32, #tpu.memory_space<smem>>
      memref.store %45, %arg2[%c1_19] : memref<4xf32, #tpu.memory_space<smem>>
      %c2_20 = arith.constant 2 : index
      %47 = memref.load %arg3[%c2_20] : memref<4xf32, #tpu.memory_space<smem>>
      %c2_21 = arith.constant 2 : index
      %48 = memref.load %arg2[%c2_21] : memref<4xf32, #tpu.memory_space<smem>>
      memref.store %47, %arg2[%c2_21] : memref<4xf32, #tpu.memory_space<smem>>
      %c3_22 = arith.constant 3 : index
      %49 = memref.load %arg3[%c3_22] : memref<4xf32, #tpu.memory_space<smem>>
      %c3_23 = arith.constant 3 : index
      %50 = memref.load %arg2[%c3_23] : memref<4xf32, #tpu.memory_space<smem>>
      memref.store %49, %arg2[%c3_23] : memref<4xf32, #tpu.memory_space<smem>>
    } else {
    }
    return
  }
  func.func @transform_0(%arg0: i32) -> (i32, i32) {
    %c0_i32 = arith.constant 0 : i32
    %c0_i32_0 = arith.constant 0 : i32
    return %arg0, %c0_i32 : i32, i32
  }
  func.func @transform_1(%arg0: i32) -> i32 {
    %c0_i32 = arith.constant 0 : i32
    %c0_i32_0 = arith.constant 0 : i32
    return %c0_i32 : i32
  }
}

module attributes {stable_mosaic.version = 11 : i64} {
  func.func @_erase_kernel(%arg0: i32, %arg1: memref<4xf32, #tpu.memory_space<smem>>, %arg2: memref<10xi32, #tpu.memory_space<smem>>, %arg3: memref<1x256xi32, #tpu.memory_space<vmem>>, %arg4: memref<1x256xi32, #tpu.memory_space<vmem>>, %arg5: memref<8x256xf32, #tpu.memory_space<vmem>>, %arg6: memref<8x256xf32, #tpu.memory_space<vmem>>, %arg7: memref<8x256xf32, #tpu.memory_space<vmem>>) attributes {dimension_semantics = [#tpu.dimension_semantics<parallel>], iteration_bounds = array<i64: 1>, scalar_prefetch = 0 : i64, scratch_operands = 0 : i64, tpu.core_type = #tpu.core_type<tc>, window_params = [{transform_indices = @transform_0, window_bounds = array<i64: 4>}, {transform_indices = @transform_1, window_bounds = array<i64: 10>}, {pipeline_mode = #tpu.pipeline_mode<synchronous>, transform_indices = @transform_2, window_bounds = array<i64: 1, 256>}, {pipeline_mode = #tpu.pipeline_mode<synchronous>, transform_indices = @transform_3, window_bounds = array<i64: 1, 256>}, {transform_indices = @transform_4, window_bounds = array<i64: 8, 256>}, {transform_indices = @transform_5, window_bounds = array<i64: 8, 256>}, {transform_indices = @transform_6, window_bounds = array<i64: 8, 256>}]} {
    %c0 = arith.constant 0 : index
    %0 = memref.load %arg1[%c0] : memref<4xf32, #tpu.memory_space<smem>>
    %c1 = arith.constant 1 : index
    %1 = memref.load %arg1[%c1] : memref<4xf32, #tpu.memory_space<smem>>
    %c2 = arith.constant 2 : index
    %2 = memref.load %arg1[%c2] : memref<4xf32, #tpu.memory_space<smem>>
    %c3 = arith.constant 3 : index
    %3 = memref.load %arg1[%c3] : memref<4xf32, #tpu.memory_space<smem>>
    %c0_0 = arith.constant 0 : index
    %c0_1 = arith.constant 0 : index
    %4 = vector.load %arg3[%c0_0, %c0_1] : memref<1x256xi32, #tpu.memory_space<vmem>>, vector<1x256xi32>
    %c0_2 = arith.constant 0 : index
    %c0_3 = arith.constant 0 : index
    %5 = vector.load %arg4[%c0_2, %c0_3] : memref<1x256xi32, #tpu.memory_space<vmem>>, vector<1x256xi32>
    %false = arith.constant false
    %6 = vector.broadcast %false : i1 to vector<1x256xi1>
    %c0_4 = arith.constant 0 : index
    %7 = memref.load %arg2[%c0_4] : memref<10xi32, #tpu.memory_space<smem>>
    %c1_5 = arith.constant 1 : index
    %8 = memref.load %arg2[%c1_5] : memref<10xi32, #tpu.memory_space<smem>>
    %9 = vector.broadcast %7 : i32 to vector<1x256xi32>
    %10 = arith.cmpi sge, %4, %9 : vector<1x256xi32>
    %c3_i32 = arith.constant 3 : i32
    %11 = arith.addi %7, %c3_i32 : i32
    %12 = vector.broadcast %11 : i32 to vector<1x256xi32>
    %13 = arith.cmpi slt, %4, %12 : vector<1x256xi32>
    %14 = arith.andi %10, %13 : vector<1x256xi1>
    %15 = vector.broadcast %8 : i32 to vector<1x256xi32>
    %16 = arith.cmpi sge, %5, %15 : vector<1x256xi32>
    %17 = arith.andi %14, %16 : vector<1x256xi1>
    %c3_i32_6 = arith.constant 3 : i32
    %18 = arith.addi %8, %c3_i32_6 : i32
    %19 = vector.broadcast %18 : i32 to vector<1x256xi32>
    %20 = arith.cmpi slt, %5, %19 : vector<1x256xi32>
    %21 = arith.andi %17, %20 : vector<1x256xi1>
    %22 = arith.ori %6, %21 : vector<1x256xi1>
    %c2_7 = arith.constant 2 : index
    %23 = memref.load %arg2[%c2_7] : memref<10xi32, #tpu.memory_space<smem>>
    %c3_8 = arith.constant 3 : index
    %24 = memref.load %arg2[%c3_8] : memref<10xi32, #tpu.memory_space<smem>>
    %25 = vector.broadcast %23 : i32 to vector<1x256xi32>
    %26 = arith.cmpi sge, %4, %25 : vector<1x256xi32>
    %c3_i32_9 = arith.constant 3 : i32
    %27 = arith.addi %23, %c3_i32_9 : i32
    %28 = vector.broadcast %27 : i32 to vector<1x256xi32>
    %29 = arith.cmpi slt, %4, %28 : vector<1x256xi32>
    %30 = arith.andi %26, %29 : vector<1x256xi1>
    %31 = vector.broadcast %24 : i32 to vector<1x256xi32>
    %32 = arith.cmpi sge, %5, %31 : vector<1x256xi32>
    %33 = arith.andi %30, %32 : vector<1x256xi1>
    %c3_i32_10 = arith.constant 3 : i32
    %34 = arith.addi %24, %c3_i32_10 : i32
    %35 = vector.broadcast %34 : i32 to vector<1x256xi32>
    %36 = arith.cmpi slt, %5, %35 : vector<1x256xi32>
    %37 = arith.andi %33, %36 : vector<1x256xi1>
    %38 = arith.ori %22, %37 : vector<1x256xi1>
    %c4 = arith.constant 4 : index
    %39 = memref.load %arg2[%c4] : memref<10xi32, #tpu.memory_space<smem>>
    %c5 = arith.constant 5 : index
    %40 = memref.load %arg2[%c5] : memref<10xi32, #tpu.memory_space<smem>>
    %41 = vector.broadcast %39 : i32 to vector<1x256xi32>
    %42 = arith.cmpi sge, %4, %41 : vector<1x256xi32>
    %c3_i32_11 = arith.constant 3 : i32
    %43 = arith.addi %39, %c3_i32_11 : i32
    %44 = vector.broadcast %43 : i32 to vector<1x256xi32>
    %45 = arith.cmpi slt, %4, %44 : vector<1x256xi32>
    %46 = arith.andi %42, %45 : vector<1x256xi1>
    %47 = vector.broadcast %40 : i32 to vector<1x256xi32>
    %48 = arith.cmpi sge, %5, %47 : vector<1x256xi32>
    %49 = arith.andi %46, %48 : vector<1x256xi1>
    %c3_i32_12 = arith.constant 3 : i32
    %50 = arith.addi %40, %c3_i32_12 : i32
    %51 = vector.broadcast %50 : i32 to vector<1x256xi32>
    %52 = arith.cmpi slt, %5, %51 : vector<1x256xi32>
    %53 = arith.andi %49, %52 : vector<1x256xi1>
    %54 = arith.ori %38, %53 : vector<1x256xi1>
    %c6 = arith.constant 6 : index
    %55 = memref.load %arg2[%c6] : memref<10xi32, #tpu.memory_space<smem>>
    %c7 = arith.constant 7 : index
    %56 = memref.load %arg2[%c7] : memref<10xi32, #tpu.memory_space<smem>>
    %57 = vector.broadcast %55 : i32 to vector<1x256xi32>
    %58 = arith.cmpi sge, %4, %57 : vector<1x256xi32>
    %c3_i32_13 = arith.constant 3 : i32
    %59 = arith.addi %55, %c3_i32_13 : i32
    %60 = vector.broadcast %59 : i32 to vector<1x256xi32>
    %61 = arith.cmpi slt, %4, %60 : vector<1x256xi32>
    %62 = arith.andi %58, %61 : vector<1x256xi1>
    %63 = vector.broadcast %56 : i32 to vector<1x256xi32>
    %64 = arith.cmpi sge, %5, %63 : vector<1x256xi32>
    %65 = arith.andi %62, %64 : vector<1x256xi1>
    %c3_i32_14 = arith.constant 3 : i32
    %66 = arith.addi %56, %c3_i32_14 : i32
    %67 = vector.broadcast %66 : i32 to vector<1x256xi32>
    %68 = arith.cmpi slt, %5, %67 : vector<1x256xi32>
    %69 = arith.andi %65, %68 : vector<1x256xi1>
    %70 = arith.ori %54, %69 : vector<1x256xi1>
    %c8 = arith.constant 8 : index
    %71 = memref.load %arg2[%c8] : memref<10xi32, #tpu.memory_space<smem>>
    %c9 = arith.constant 9 : index
    %72 = memref.load %arg2[%c9] : memref<10xi32, #tpu.memory_space<smem>>
    %73 = vector.broadcast %71 : i32 to vector<1x256xi32>
    %74 = arith.cmpi sge, %4, %73 : vector<1x256xi32>
    %c3_i32_15 = arith.constant 3 : i32
    %75 = arith.addi %71, %c3_i32_15 : i32
    %76 = vector.broadcast %75 : i32 to vector<1x256xi32>
    %77 = arith.cmpi slt, %4, %76 : vector<1x256xi32>
    %78 = arith.andi %74, %77 : vector<1x256xi1>
    %79 = vector.broadcast %72 : i32 to vector<1x256xi32>
    %80 = arith.cmpi sge, %5, %79 : vector<1x256xi32>
    %81 = arith.andi %78, %80 : vector<1x256xi1>
    %c3_i32_16 = arith.constant 3 : i32
    %82 = arith.addi %72, %c3_i32_16 : i32
    %83 = vector.broadcast %82 : i32 to vector<1x256xi32>
    %84 = arith.cmpi slt, %5, %83 : vector<1x256xi32>
    %85 = arith.andi %81, %84 : vector<1x256xi1>
    %86 = arith.ori %70, %85 : vector<1x256xi1>
    %c0_17 = arith.constant 0 : index
    %c0_18 = arith.constant 0 : index
    %87 = vector.load %arg5[%c0_17, %c0_18] : memref<8x256xf32, #tpu.memory_space<vmem>>, vector<8x256xf32>
    %c0_19 = arith.constant 0 : index
    %c0_20 = arith.constant 0 : index
    %88 = vector.load %arg6[%c0_19, %c0_20] : memref<8x256xf32, #tpu.memory_space<vmem>>, vector<8x256xf32>
    %89 = vector.broadcast %1 : f32 to vector<8x256xf32>
    %90 = arith.mulf %89, %88 : vector<8x256xf32>
    %91 = vector.broadcast %0 : f32 to vector<8x256xf32>
    %92 = arith.addf %91, %90 : vector<8x256xf32>
    %93 = vector.shape_cast %86 : vector<1x256xi1> to vector<1x256xi1>
    %94 = vector.broadcast %93 : vector<1x256xi1> to vector<8x256xi1>
    %95 = arith.select %94, %92, %87 : vector<8x256xi1>, vector<8x256xf32>
    %96 = vector.broadcast %2 : f32 to vector<8x256xf32>
    %97 = arith.maximumf %96, %95 : vector<8x256xf32>
    %98 = vector.broadcast %3 : f32 to vector<8x256xf32>
    %99 = arith.minimumf %98, %97 : vector<8x256xf32>
    %c0_21 = arith.constant 0 : index
    %c0_22 = arith.constant 0 : index
    %100 = vector.load %arg7[%c0_21, %c0_22] : memref<8x256xf32, #tpu.memory_space<vmem>>, vector<8x256xf32>
    tpu.vector_store %arg7[%c0_21, %c0_22], %99 {strides = array<i32>} : memref<8x256xf32, #tpu.memory_space<vmem>>, vector<8x256xf32>,
    return
  }
  func.func @transform_0(%arg0: i32) -> i32 {
    %c0_i32 = arith.constant 0 : i32
    %c0_i32_0 = arith.constant 0 : i32
    return %c0_i32 : i32
  }
  func.func @transform_1(%arg0: i32) -> i32 {
    %c0_i32 = arith.constant 0 : i32
    %c0_i32_0 = arith.constant 0 : i32
    return %c0_i32 : i32
  }
  func.func @transform_2(%arg0: i32) -> (i32, i32) {
    %c0_i32 = arith.constant 0 : i32
    %c0_i32_0 = arith.constant 0 : i32
    %c0_i32_1 = arith.constant 0 : i32
    return %c0_i32, %c0_i32_0 : i32, i32
  }
  func.func @transform_3(%arg0: i32) -> (i32, i32) {
    %c0_i32 = arith.constant 0 : i32
    %c0_i32_0 = arith.constant 0 : i32
    %c0_i32_1 = arith.constant 0 : i32
    return %c0_i32, %c0_i32_0 : i32, i32
  }
  func.func @transform_4(%arg0: i32) -> (i32, i32) {
    %c0_i32 = arith.constant 0 : i32
    %c0_i32_0 = arith.constant 0 : i32
    return %arg0, %c0_i32 : i32, i32
  }
  func.func @transform_5(%arg0: i32) -> (i32, i32) {
    %c0_i32 = arith.constant 0 : i32
    %c0_i32_0 = arith.constant 0 : i32
    return %arg0, %c0_i32 : i32, i32
  }
  func.func @transform_6(%arg0: i32) -> (i32, i32) {
    %c0_i32 = arith.constant 0 : i32
    %c0_i32_0 = arith.constant 0 : i32
    return %arg0, %c0_i32 : i32, i32
  }
}

</mosaic_0001>

<llo_original>
// kernel: rand_erase.4
$region0: #{rand_erase.4}
  #allocation0 [shape = 'u32[]', space=smem, size = 0x4, offset = 0x4, fixed_abs, tag = 'smem constant byte address 0x4 - core index']
  #allocation1 [shape = 'u32[144,128]{1,0:T(1,128)}', space=vmem, size = 0x12000, scoped, tag = 'internal scratch']
  #allocation2 [shape = 'f32[4]{0:T(128)}', space=smem, size = 0x200, scoped, tag = 'scratch operand']
  %s0 = inlined_call_operand.vmem [shape: f32[8,256], index: 0, kind: input, shape index: {}]
  %s1 = inlined_call_operand.vmem [shape: f32[4], index: 1, kind: output, shape index: {}]
  %s2 = sld [smem:[#allocation0]]
  $region22: #{rand_erase.4} parent=0
    _
  %s4 = ssub.s32 1, %s2
  %s5 = scalar_select 0, %s4, %s2
  $region1: #{rand_erase.4} parent=0
    #allocation3 [shape = 'u8[512]{0}', space=smem, size = 0x200, scoped, tag = 'output window, operand 0, single buffered']
    #allocation4 [shape = 's32[1]{0}', space=sflag, size = 0x4, scoped, tag = 'scoped memory for rand_erase.4']
    %6 = vsyncpa [#allocation4], 0
    // Predicated region
    $region2: #{rand_erase.4} parent=1 // pred_check
      _
    $region3: #{rand_erase.4} parent=1 // pred_check_branch
      %8 = sbr.rel (0) target = $region5
    $region4: #{rand_erase.4} parent=1 // pred_region
      _
    $region5: #{rand_erase.4} parent=1 // pred_fallthru
      _
    %p9 = scmp.eq.s32.totalorder 0, 0
    // Predicated region
    $region6: #{rand_erase.4} parent=1 // pred_check
      %p10 = pneg %p9
    $region7: #{rand_erase.4} parent=1 // pred_check_branch
      %12 = sbr.rel (%p10) target = $region9
    $region8: #{rand_erase.4} parent=1 // pred_region
      %s13 = scalar_lea.smem [#allocation2], 0
      %14 = sst [smem:[%s13]] 0.0
      %s15 = scalar_lea.smem [#allocation2], 1
      %16 = sst [smem:[%s15]] 0.0
      %s17 = scalar_lea.smem [#allocation2], 2
      %18 = sst [smem:[%s17]] inf
      %s19 = scalar_lea.smem [#allocation2], 3
      %20 = sst [smem:[%s19]] -inf
    $region9: #{rand_erase.4} parent=1 // pred_fallthru
      _
    %v21 = vld [vmem:[%s0] sm:$0xff]
    %v22 = vld [vmem:[%s0 + $0x8] sm:$0xff]
    %s23 = sld [smem:[#allocation2]]
    %v24 = vadd.f32 %v21, %v22
    %25 = vadd.xlane.f32.xlu0 %v24
    %v26 = vpop.xlane.xlu0 %25
    %v27 = vrot.slane %v26, 4
    %v28 = vadd.f32 %v26, %v27
    %v29 = vrot.slane %v28, 2
    %v30 = vadd.f32 %v28, %v29
    %v31 = vrot.slane %v30, 1
    %v32 = vadd.f32 %v30, %v31
    %s33 = vtos %v32
    %s34 = sadd.f32 %s23, %s33
    %s35 = scalar_lea.smem [#allocation2], 0
    %36 = sst [smem:[%s35]] %s34
    %s37 = sld [smem:[#allocation2 + $0x1]]
    %v38 = vmul.f32 %v21, %v21
    %v39 = vmul.f32 %v22, %v22
    %v40 = vadd.f32 %v38, %v39
    %41 = vadd.xlane.f32.xlu0 %v40
    %v42 = vpop.xlane.xlu0 %41
    %v43 = vrot.slane %v42, 4
    %v44 = vadd.f32 %v42, %v43
    %v45 = vrot.slane %v44, 2
    %v46 = vadd.f32 %v44, %v45
    %v47 = vrot.slane %v46, 1
    %v48 = vadd.f32 %v46, %v47
    %s49 = vtos %v48
    %s50 = sadd.f32 %s37, %s49
    %s51 = scalar_lea.smem [#allocation2], 1
    %52 = sst [smem:[%s51]] %s50
    %s53 = sld [smem:[#allocation2 + $0x2]]
    %v54 = vmin.f32 %v21, %v22
    %55 = vmin.xlane.f32.xlu0 %v54
    %v56 = vpop.xlane.xlu0 %55
    %v57 = vrot.slane %v56, 4
    %v58 = vmin.f32 %v56, %v57
    %v59 = vrot.slane %v58, 2
    %v60 = vmin.f32 %v58, %v59
    %v61 = vrot.slane %v60, 1
    %v62 = vmin.f32 %v60, %v61
    %s63 = vtos %v62
    %s64 = smin.f32 %s53, %s63
    %s65 = scalar_lea.smem [#allocation2], 2
    %66 = sst [smem:[%s65]] %s64
    %s67 = sld [smem:[#allocation2 + $0x3]]
    %v68 = vmax.f32 %v21, %v22
    %69 = vmax.xlane.f32.xlu0 %v68
    %v70 = vpop.xlane.xlu0 %69
    %v71 = vrot.slane %v70, 4
    %v72 = vmax.f32 %v70, %v71
    %v73 = vrot.slane %v72, 2
    %v74 = vmax.f32 %v72, %v73
    %v75 = vrot.slane %v74, 1
    %v76 = vmax.f32 %v74, %v75
    %s77 = vtos %v76
    %s78 = smax.f32 %s67, %s77
    %s79 = scalar_lea.smem [#allocation2], 3
    %80 = sst [smem:[%s79]] %s78
    // Predicated region
    $region10: #{rand_erase.4} parent=1 // pred_check
      %p81 = pneg %p9
    $region11: #{rand_erase.4} parent=1 // pred_check_branch
      %83 = sbr.rel (%p81) target = $region13
    $region12: #{rand_erase.4} parent=1 // pred_region
      %s84 = sld [smem:[#allocation2]]
      %s85 = sld [smem:[#allocation2 + $0x1]]
      %v86 = vrcp.pop 2048.0
      %s87 = vtos %v86
      %s88 = smul.f32 %s84, %s87
      %s89 = smul.f32 %s88, 2048.0
      %s90 = smul.f32 %s89, %s88
      %s91 = ssub.f32 %s85, %s90
      %v92 = vrcp.pop 2047.0
      %s93 = vtos %v92
      %s94 = smul.f32 %s91, %s93
      %s95 = scalar_lea.smem [#allocation3], 0
      %96 = sst [smem:[%s95]] %s88
      %s97 = smax.f32 %s94, 0.0
      %v98 = vstv %s97
      %v99 = vrsqrt.pop %v98
      %v100 = vmul.f32 %v98, %v99
      %vm101 = vcmp.eq.f32.partialorder %v98, inf
      %v102 = vsel %vm101, %v98, %v100
      %vm103 = vcmp.eq.f32.partialorder %v98, 0.0
      %v104 = vand.u32 %v98, 2147483648
      %v105 = vsel %vm103, %v104, %v102
      %s106 = vtos %v105
      %s107 = scalar_lea.smem [#allocation3], 1
      %108 = sst [smem:[%s107]] %s106
      %s109 = sld [smem:[#allocation2 + $0x2]]
      %s110 = scalar_lea.smem [#allocation3], 2
      %111 = sst [smem:[%s110]] %s109
      %s112 = sld [smem:[#allocation2 + $0x3]]
      %s113 = scalar_lea.smem [#allocation3], 3
      %114 = sst [smem:[%s113]] %s112
    $region13: #{rand_erase.4} parent=1 // pred_fallthru
      _
    // Predicated region
    $region14: #{rand_erase.4} parent=1 // pred_check
      _
    $region15: #{rand_erase.4} parent=1 // pred_check_branch
      %116 = sbr.rel (0) target = $region17
    $region16: #{rand_erase.4} parent=1 // pred_region
      %s118 = ssub.s32 16, 16
      %119 = vsyncadd [#allocation4], %s118
      %s121 = sshll.u32 %s1, 4
      %s122 = int_to_ptr.vmem [resolvable:$true] %s121
      %124 = dma.smem_to_vmem [#allocation3], 16, %s122, [#allocation4]
    $region17: #{rand_erase.4} parent=1 // pred_fallthru
      _
    // Predicated region
    $region18: #{rand_erase.4} parent=1 // pred_check
      _
    $region19: #{rand_erase.4} parent=1 // pred_check_branch
      %126 = sbr.rel (0) target = $region21
    $region20: #{rand_erase.4} parent=1 // pred_region
      %127 = dma.done [#allocation4], 16
    $region21: #{rand_erase.4} parent=1 // pred_fallthru
      _
    %128 = sfence
    %129 = vsyncpa [#allocation4], 1

// kernel: rand_erase.5
$region0: #{rand_erase.5}
  #allocation0 [shape = 'u32[]', space=smem, size = 0x4, offset = 0x4, fixed_abs, tag = 'smem constant byte address 0x4 - core index']
  #allocation1 [shape = 'u32[144,128]{1,0:T(1,128)}', space=vmem, size = 0x12000, scoped, tag = 'internal scratch']
  %s0 = inlined_call_operand.vmem [shape: f32[4], index: 0, kind: input, shape index: {}]
  %s1 = inlined_call_operand.vmem [shape: s32[10], index: 1, kind: input, shape index: {}]
  %s2 = inlined_call_operand.vmem [shape: s32[1,256], index: 2, kind: input, shape index: {}]
  %s3 = inlined_call_operand.vmem [shape: s32[1,256], index: 3, kind: input, shape index: {}]
  %s4 = inlined_call_operand.vmem [shape: f32[8,256], index: 4, kind: input, shape index: {}, may-alias: {4,6}]
  %s5 = inlined_call_operand.vmem [shape: f32[8,256], index: 5, kind: input, shape index: {}]
  %s6 = inlined_call_operand.vmem [shape: f32[8,256], index: 6, kind: output, shape index: {}, may-alias: {4,6}]
  %s7 = sld [smem:[#allocation0]]
  $region42: #{rand_erase.5} parent=0
    _
  %s9 = ssub.s32 1, %s7
  %s10 = scalar_select 0, %s9, %s7
  $region1: #{rand_erase.5} parent=0
    #allocation2 [shape = 'u8[512]{0}', space=smem, size = 0x200, scoped, tag = 'input window, operand 0, single buffered']
    #allocation3 [shape = 's32[1]{0}', space=sflag, size = 0x4, scoped, tag = 'scoped memory for rand_erase.5']
    #allocation4 [shape = 'u8[512]{0}', space=smem, size = 0x200, scoped, tag = 'input window, operand 1, single buffered']
    #allocation5 [shape = 's32[1]{0}', space=sflag, size = 0x4, scoped, tag = 'scoped memory for rand_erase.5']
    %11 = vsyncpa [#allocation3], 0
    %12 = vsyncpa [#allocation5], 0
    // Predicated region
    $region2: #{rand_erase.5} parent=1 // pred_check
      _
    $region3: #{rand_erase.5} parent=1 // pred_check_branch
      %14 = sbr.rel (0) target = $region5
    $region4: #{rand_erase.5} parent=1 // pred_region
      %s16 = ssub.s32 16, 16
      %17 = vsyncadd [#allocation3], %s16
      %s19 = sshll.u32 %s0, 4
      %s20 = int_to_ptr.vmem [resolvable:$true] %s19
      %22 = dma.vmem_to_smem %s20, 16, [#allocation2], [#allocation3]
    $region5: #{rand_erase.5} parent=1 // pred_fallthru
      _
    // Predicated region
    $region6: #{rand_erase.5} parent=1 // pred_check
      _
    $region7: #{rand_erase.5} parent=1 // pred_check_branch
      %24 = sbr.rel (0) target = $region9
    $region8: #{rand_erase.5} parent=1 // pred_region
      %s26 = ssub.s32 16, 16
      %27 = vsyncadd [#allocation5], %s26
      %s29 = sshll.u32 %s1, 4
      %s30 = int_to_ptr.vmem [resolvable:$true] %s29
      %32 = dma.vmem_to_smem %s30, 16, [#allocation4], [#allocation5]
    $region9: #{rand_erase.5} parent=1 // pred_fallthru
      _
    // Predicated region
    $region10: #{rand_erase.5} parent=1 // pred_check
      _
    $region11: #{rand_erase.5} parent=1 // pred_check_branch
      %34 = sbr.rel (0) target = $region13
    $region12: #{rand_erase.5} parent=1 // pred_region
      _
    $region13: #{rand_erase.5} parent=1 // pred_fallthru
      _
    // Predicated region
    $region14: #{rand_erase.5} parent=1 // pred_check
      _
    $region15: #{rand_erase.5} parent=1 // pred_check_branch
      %36 = sbr.rel (0) target = $region17
    $region16: #{rand_erase.5} parent=1 // pred_region
      _
    $region17: #{rand_erase.5} parent=1 // pred_fallthru
      _
    // Predicated region
    $region18: #{rand_erase.5} parent=1 // pred_check
      _
    $region19: #{rand_erase.5} parent=1 // pred_check_branch
      %38 = sbr.rel (0) target = $region21
    $region20: #{rand_erase.5} parent=1 // pred_region
      _
    $region21: #{rand_erase.5} parent=1 // pred_fallthru
      _
    // Predicated region
    $region22: #{rand_erase.5} parent=1 // pred_check
      _
    $region23: #{rand_erase.5} parent=1 // pred_check_branch
      %40 = sbr.rel (0) target = $region25
    $region24: #{rand_erase.5} parent=1 // pred_region
      _
    $region25: #{rand_erase.5} parent=1 // pred_fallthru
      _
    // Predicated region
    $region26: #{rand_erase.5} parent=1 // pred_check
      _
    $region27: #{rand_erase.5} parent=1 // pred_check_branch
      %42 = sbr.rel (0) target = $region29
    $region28: #{rand_erase.5} parent=1 // pred_region
      %43 = dma.done [#allocation3], 16
    $region29: #{rand_erase.5} parent=1 // pred_fallthru
      _
    // Predicated region
    $region30: #{rand_erase.5} parent=1 // pred_check
      _
    $region31: #{rand_erase.5} parent=1 // pred_check_branch
      %45 = sbr.rel (0) target = $region33
    $region32: #{rand_erase.5} parent=1 // pred_region
      %46 = dma.done [#allocation5], 16
    $region33: #{rand_erase.5} parent=1 // pred_fallthru
      _
    %47 = sfence
    %s48 = sld [smem:[#allocation2]]
    %s49 = sld [smem:[#allocation2 + $0x1]]
    %s50 = sld [smem:[#allocation2 + $0x2]]
    %s51 = sld [smem:[#allocation2 + $0x3]]
    %v52 = vld [vmem:[%s2] sm:$0x3]
    %v53 = vld [vmem:[%s3] sm:$0x3]
    %s54 = sld [smem:[#allocation4]]
    %s55 = sld [smem:[#allocation4 + $0x1]]
    %v56 = vstv %s54
    %vm57 = vcmp.ge.s32.totalorder %v52, %v56
    %s58 = sadd.s32 %s54, 3
    %v59 = vstv %s58
    %vm60 = vcmp.lt.s32.totalorder %v52, %v59
    %vm61 = vmand %vm57, %vm60
    %v62 = vstv %s55
    %vm63 = vcmp.ge.s32.totalorder %v53, %v62
    %vm64 = vmand %vm61, %vm63
    %s65 = sadd.s32 %s55, 3
    %v66 = vstv %s65
    %vm67 = vcmp.lt.s32.totalorder %v53, %v66
    %vm68 = vmand %vm64, %vm67
    %s69 = sld [smem:[#allocation4 + $0x2]]
    %s70 = sld [smem:[#allocation4 + $0x3]]
    %v71 = vstv %s69
    %vm72 = vcmp.ge.s32.totalorder %v52, %v71
    %s73 = sadd.s32 %s69, 3
    %v74 = vstv %s73
    %vm75 = vcmp.lt.s32.totalorder %v52, %v74
    %vm76 = vmand %vm72, %vm75
    %v77 = vstv %s70
    %vm78 = vcmp.ge.s32.totalorder %v53, %v77
    %vm79 = vmand %vm76, %vm78
    %s80 = sadd.s32 %s70, 3
    %v81 = vstv %s80
    %vm82 = vcmp.lt.s32.totalorder %v53, %v81
    %vm83 = vmand %vm79, %vm82
    %vm84 = vmor %vm68, %vm83
    %s85 = sld [smem:[#allocation4 + $0x4]]
    %s86 = sld [smem:[#allocation4 + $0x5]]
    %v87 = vstv %s85
    %vm88 = vcmp.ge.s32.totalorder %v52, %v87
    %s89 = sadd.s32 %s85, 3
    %v90 = vstv %s89
    %vm91 = vcmp.lt.s32.totalorder %v52, %v90
    %vm92 = vmand %vm88, %vm91
    %v93 = vstv %s86
    %vm94 = vcmp.ge.s32.totalorder %v53, %v93
    %vm95 = vmand %vm92, %vm94
    %s96 = sadd.s32 %s86, 3
    %v97 = vstv %s96
    %vm98 = vcmp.lt.s32.totalorder %v53, %v97
    %vm99 = vmand %vm95, %vm98
    %vm100 = vmor %vm84, %vm99
    %s101 = sld [smem:[#allocation4 + $0x6]]
    %s102 = sld [smem:[#allocation4 + $0x7]]
    %v103 = vstv %s101
    %vm104 = vcmp.ge.s32.totalorder %v52, %v103
    %s105 = sadd.s32 %s101, 3
    %v106 = vstv %s105
    %vm107 = vcmp.lt.s32.totalorder %v52, %v106
    %vm108 = vmand %vm104, %vm107
    %v109 = vstv %s102
    %vm110 = vcmp.ge.s32.totalorder %v53, %v109
    %vm111 = vmand %vm108, %vm110
    %s112 = sadd.s32 %s102, 3
    %v113 = vstv %s112
    %vm114 = vcmp.lt.s32.totalorder %v53, %v113
    %vm115 = vmand %vm111, %vm114
    %vm116 = vmor %vm100, %vm115
    %s117 = sld [smem:[#allocation4 + $0x8]]
    %s118 = sld [smem:[#allocation4 + $0x9]]
    %v119 = vstv %s117
    %vm120 = vcmp.ge.s32.totalorder %v52, %v119
    %s121 = sadd.s32 %s117, 3
    %v122 = vstv %s121
    %vm123 = vcmp.lt.s32.totalorder %v52, %v122
    %vm124 = vmand %vm120, %vm123
    %v125 = vstv %s118
    %vm126 = vcmp.ge.s32.totalorder %v53, %v125
    %vm127 = vmand %vm124, %vm126
    %s128 = sadd.s32 %s118, 3
    %v129 = vstv %s128
    %vm130 = vcmp.lt.s32.totalorder %v53, %v129
    %vm131 = vmand %vm127, %vm130
    %vm132 = vmor %vm116, %vm131
    %v133 = vld [vmem:[%s4] sm:$0xff]
    %v134 = vld [vmem:[%s4 + $0x8] sm:$0xff]
    %v135 = vld [vmem:[%s5] sm:$0xff]
    %v136 = vld [vmem:[%s5 + $0x8] sm:$0xff]
    %v137 = vstv %s49
    %v138 = vmul.f32 %v137, %v135
    %v139 = vmul.f32 %v137, %v136
    %v140 = vstv %s48
    %v141 = vadd.f32 %v140, %v138
    %v142 = vadd.f32 %v140, %v139
    %v143 = vsel %vm132, 1, 0
    %v144 = vlaneseq
    %v145 = vshrl.u32 %v144, 7
    %v146 = vsub.s32 0, %v145
    %v147 = vrot.slane %v143, %v146
    %v148 = vlaneseq
    %v149 = vshrl.u32 %v148, 7
    %v150 = vsub.s32 1, %v149
    %v151 = vrot.slane %v143, %v150
    %vm152 = vcmp.eq.s32.totalorder %v147, 1
    %vm153 = vcmp.eq.s32.totalorder %v151, 1
    %v154 = vsel %vm152, %v141, %v133
    %v155 = vsel %vm153, %v142, %v134
    %v156 = vstv %s50
    %v157 = vmax.f32 %v156, %v154
    %v158 = vmax.f32 %v156, %v155
    %v159 = vstv %s51
    %v160 = vmin.f32 %v159, %v157
    %v161 = vmin.f32 %v159, %v158
    %162 = vst [vmem:[%s6] sm:$0xff] %v160
    %163 = vst [vmem:[%s6 + $0x8] sm:$0xff] %v161
    // Predicated region
    $region34: #{rand_erase.5} parent=1 // pred_check
      _
    $region35: #{rand_erase.5} parent=1 // pred_check_branch
      %165 = sbr.rel (0) target = $region37
    $region36: #{rand_erase.5} parent=1 // pred_region
      _
    $region37: #{rand_erase.5} parent=1 // pred_fallthru
      _
    // Predicated region
    $region38: #{rand_erase.5} parent=1 // pred_check
      _
    $region39: #{rand_erase.5} parent=1 // pred_check_branch
      %167 = sbr.rel (0) target = $region41
    $region40: #{rand_erase.5} parent=1 // pred_region
      _
    $region41: #{rand_erase.5} parent=1 // pred_fallthru
      _
    %168 = vsyncpa [#allocation3], 1
    %169 = vsyncpa [#allocation5], 1

</llo_original>
